<compile_context>
chip_gen: v7x
topology: tpu7x:2x2x1
jax: 0.10.0
libtpu: 0.0.40
codegen_flags: <defaults>
</compile_context>

<pallas_src>
import functools

import jax
import jax.numpy as jnp
from jax.experimental import pallas as pl
from jax.experimental.pallas import tpu as pltpu

_SUBLANE = {4: 8, 2: 16, 1: 32}   # min sublane tile by itemsize (f32/bf16/int8)
_LANE = 128


def _round_up(v, m):
    return ((v + m - 1) // m) * m


def _cdiv(a, b):
    return (a + b - 1) // b


def _vmem_capacity_bytes():
    """Per-TensorCore VMEM capacity; conservative fallback if query fails."""
    default = 64 * 1024 * 1024            # v7x per-TC physical (smallest gen)
    try:
        cap = int(pltpu.get_tpu_info().vmem_capacity_bytes)
    except Exception:
        return default
    if cap <= 0:
        return default
    return max(32 * 1024 * 1024, min(cap, 256 * 1024 * 1024))


# --------------------------------------------------------------------------- #
# Kernels
# --------------------------------------------------------------------------- #
def _linear_kernel(x_ref, w_ref, b_ref, o_ref, *, compute_dtype):
    # x:(tm,K)  w:(K,tn)  b:(1,tn)  o:(tm,tn); f32 accumulation on the MXU.
    # TODO(synk): if strict fp32 parity with torch nn.Linear is required for
    # very large C_in, force highest matmul precision here; Mosaic's default
    # f32 handling already matches the 1e-5 tolerance in the tests below.
    x = x_ref[...].astype(compute_dtype)
    acc = jnp.dot(x, w_ref[...], preferred_element_type=jnp.float32)
    o_ref[...] = (acc + b_ref[...].astype(jnp.float32)).astype(o_ref.dtype)


def _linear_kernel_ktiled(x_ref, w_ref, b_ref, o_ref, acc_ref, *, compute_dtype):
    # Same as above but with the contraction split over grid axis 2 and
    # accumulated in an f32 VMEM scratch (init at k==0, bias+store at k==last).
    k = pl.program_id(2)

    @pl.when(k == 0)
    def _():
        acc_ref[...] = jnp.zeros_like(acc_ref)

    x = x_ref[...].astype(compute_dtype)
    acc_ref[...] += jnp.dot(x, w_ref[...], preferred_element_type=jnp.float32)

    @pl.when(k == pl.num_programs(2) - 1)
    def _():
        o_ref[...] = (acc_ref[...] + b_ref[...].astype(jnp.float32)).astype(o_ref.dtype)


# --------------------------------------------------------------------------- #
# Tile / path selection
# --------------------------------------------------------------------------- #
def _select_plan(M, K, N, isz_x, isz_w, budget, tm_req, tn_req, tk_req):
    """Return (mode, tm, tn, tk).

    mode "A": 1-D row grid, whole weight resident (single-buffered).
    mode "B": 2-D grid (M outer, N inner), full K per step.
    mode "C": 3-D grid (M, N, K-arbitrary) with f32 accumulator scratch.
    """
    sub = _SUBLANE.get(isz_x, 8)
    rup = _round_up

    # Row tile: big, to amortize the ~0.35 us/step pipeline overhead.
    tm = tm_req if tm_req is not None else 1024
    tm = max(sub, min(rup(tm, sub), rup(M, sub)))
    # v7x has 2 TensorCores: make sure the parallel row axis has >= 2 steps.
    if _cdiv(M, tm) < 2 and M > 2 * sub:
        tm = rup(_cdiv(M, 2), sub)

    bias_b = 8 * N + 4096                         # generous bias accounting

    def a_bytes(tm_):    # resident weight (1 buffer) + double-buffered x/out
        return 2 * tm_ * K * isz_x + 2 * tm_ * N * isz_x + K * N * isz_w + bias_b

    def b_bytes(tm_, tn_):
        return (2 * tm_ * K * isz_x + 2 * tm_ * tn_ * isz_x
                + 2 * K * tn_ * isz_w + bias_b)

    def c_bytes(tm_, tn_, tk_):
        return (2 * tm_ * tk_ * isz_x + 2 * tm_ * tn_ * isz_x
                + 2 * tk_ * tn_ * isz_w + 4 * tm_ * tn_ + bias_b)

    forced_c = tk_req is not None and rup(tk_req, _LANE) < rup(K, _LANE)
    forced_b = (not forced_c and tn_req is not None
                and rup(tn_req, _LANE) < rup(N, _LANE))

    # --- mode A: whole (possibly unaligned) hidden dim as one resident block.
    if not (forced_b or forced_c):
        t = tm
        floor = max(sub, min(256, t))
        while a_bytes(t) > budget and t > floor:
            t = max(floor, rup(t // 2, sub))
        if a_bytes(t) <= budget:
            return "A", t, N, K

    # --- column tile for modes B / C (lane-dense, never below 128).
    if tn_req is not None:
        tn = max(_LANE, min(rup(tn_req, _LANE), rup(N, _LANE)))
    else:
        tn = max(_LANE, min(rup(N, _LANE), 4096))

    # --- mode B: full K per step; M outer so the activation streams once.
    if not forced_c:
        t, n = tm, tn
        while b_bytes(t, n) > budget and n > _LANE:
            n = max(_LANE, rup(n // 2, _LANE))
        while b_bytes(t, n) > budget and t > sub:
            t = max(sub, rup(t // 2, sub))
        if b_bytes(t, n) <= budget:
            return "B", t, n, K

    # --- mode C: K-tiled accumulator fallback for very wide layers.
    if tk_req is not None:
        tk = max(_LANE, min(rup(tk_req, _LANE), rup(K, _LANE)))
    else:
        tk = max(_LANE, min(rup(K, _LANE), 2048))
    t, n = tm, tn
    while c_bytes(t, n, tk) > budget and tk > _LANE:
        tk = max(_LANE, rup(tk // 2, _LANE))
    while c_bytes(t, n, tk) > budget and n > _LANE:
        n = max(_LANE, rup(n // 2, _LANE))
    while c_bytes(t, n, tk) > budget and t > sub:
        t = max(sub, rup(t // 2, sub))
    return "C", t, n, tk   # best effort; vmem_limit_bytes gives extra headroom


def _maybe_single(block_shape, index_map, single_buffer):
    # Resident blocks (constant index map) don't need double buffering.
    if single_buffer and hasattr(pl, "Buffered"):
        return pl.BlockSpec(block_shape, index_map, pipeline_mode=pl.Buffered(1))
    return pl.BlockSpec(block_shape, index_map)


# --------------------------------------------------------------------------- #
# Wrapper (forward of EncoderWithFC)
# --------------------------------------------------------------------------- #
def encoder_with_fc(x, weight, bias, *, tm=None, tn=None, tk=None,
                    compute_dtype=None, force_pallas=False):
    """x:(B, T, C_in); weight:(hidden, C_in); bias:(hidden,) -> (B, T, hidden)."""
    B, T, C_in = x.shape
    hidden, c_in_w = weight.shape
    assert c_in_w == C_in, "weight / in_channels mismatch"
    M = B * T
    out_dtype = x.dtype

    # Tiny problems: a pallas_call launch + grid overhead dwarfs the FLOPs.
    if not force_pallas and (M * C_in * hidden) < (1 << 20):
        cd = compute_dtype if compute_dtype is not None else x.dtype
        y = jnp.dot(x.reshape(M, C_in).astype(cd), weight.T.astype(cd),
                    preferred_element_type=jnp.float32)
        y = (y + bias.astype(jnp.float32)).astype(out_dtype)
        return y.reshape(B, T, hidden)

    # MXU operand dtype (opt-in bf16 compute for f32 inputs; unchanged else).
    w_dtype = compute_dtype if compute_dtype is not None else x.dtype
    w_t = weight.T.astype(w_dtype)         # (C_in, hidden): tiny copy
    b2d = bias.reshape(1, hidden)
    x2d = x.reshape(M, C_in)               # no pad: cdiv grids handle remainders

    isz_x = jnp.dtype(x.dtype).itemsize
    isz_w = jnp.dtype(w_dtype).itemsize

    # Generation-aware VMEM accounting (per TensorCore).
    vmem_cap = _vmem_capacity_bytes()
    budget = min(vmem_cap * 3 // 8, 64 * 1024 * 1024)      # ~24MiB v7x, ~48MiB v5e/v6e
    vmem_limit = min(vmem_cap * 3 // 4, 96 * 1024 * 1024)  # ~48MiB v7x, ~96MiB v5e/v6e

    mode, tm_, tn_, tk_ = _select_plan(M, C_in, hidden, isz_x, isz_w,
                                       budget, tm, tn, tk)

    if mode == "A":
        # Single resident N block: weight/bias DMA'd once, x streamed once.
        grid = (_cdiv(M, tm_),)
        dims = ("parallel",)
        kernel = functools.partial(_linear_kernel, compute_dtype=w_dtype)
        scratch = []
        out_specs = pl.BlockSpec((tm_, hidden), lambda i: (i, 0))

        def make_in_specs(single_buffer):
            return [
                pl.BlockSpec((tm_, C_in), lambda i: (i, 0)),
                _maybe_single((C_in, hidden), lambda i: (0, 0), single_buffer),
                _maybe_single((1, hidden), lambda i: (0, 0), single_buffer),
            ]

    elif mode == "B":
        # M outer / N inner: the big activation tile is fetched once per row
        # block; only the small (C_in, tn) weight tile is re-read per N step.
        grid = (_cdiv(M, tm_), _cdiv(hidden, tn_))
        dims = ("parallel", "parallel")
        kernel = functools.partial(_linear_kernel, compute_dtype=w_dtype)
        scratch = []
        out_specs = pl.BlockSpec((tm_, tn_), lambda i, j: (i, j))

        def make_in_specs(single_buffer):
            del single_buffer   # weight/bias index maps vary on the inner axis
            return [
                pl.BlockSpec((tm_, C_in), lambda i, j: (i, 0)),
                pl.BlockSpec((C_in, tn_), lambda i, j: (0, j)),
                pl.BlockSpec((1, tn_), lambda i, j: (0, j)),
            ]

    else:
        # mode "C": K-tiled accumulator fallback for very wide layers.  Only
        # the contraction dim is zero-padded (zeros are numerically inert).
        Kp = _round_up(C_in, tk_)
        if Kp != C_in:
            x2d = jnp.pad(x2d, ((0, 0), (0, Kp - C_in)))
            w_t = jnp.pad(w_t, ((0, Kp - C_in), (0, 0)))
        grid = (_cdiv(M, tm_), _cdiv(hidden, tn_), Kp // tk_)
        dims = ("parallel", "parallel", "arbitrary")
        kernel = functools.partial(_linear_kernel_ktiled, compute_dtype=w_dtype)
        scratch = [pltpu.VMEM((tm_, tn_), jnp.float32)]
        out_specs = pl.BlockSpec((tm_, tn_), lambda i, j, k: (i, j))

        def make_in_specs(single_buffer):
            del single_buffer
            return [
                pl.BlockSpec((tm_, tk_), lambda i, j, k: (i, k)),
                pl.BlockSpec((tk_, tn_), lambda i, j, k: (k, j)),
                pl.BlockSpec((1, tn_), lambda i, j, k: (0, j)),
            ]

    cost = pl.CostEstimate(
        flops=2 * M * C_in * hidden,
        transcendentals=0,
        bytes_accessed=(M * C_in * isz_x + C_in * hidden * isz_w
                        + hidden * jnp.dtype(bias.dtype).itemsize
                        + M * hidden * isz_x),
    )

    def run(single_buffer):
        return pl.pallas_call(
            kernel,
            out_shape=jax.ShapeDtypeStruct((M, hidden), out_dtype),
            grid=grid,
            in_specs=make_in_specs(single_buffer),
            out_specs=out_specs,
            scratch_shapes=scratch,
            compiler_params=pltpu.CompilerParams(
                dimension_semantics=dims, vmem_limit_bytes=int(vmem_limit)),
            cost_estimate=cost,
        )(x2d, w_t, b2d)

    try:
        out2d = run(single_buffer=True)
    except Exception:
        # pl.Buffered(1) (single-buffered resident weight) unsupported on this
        # jax/libtpu build -> retry with default double buffering.
        out2d = run(single_buffer=False)

    return out2d.reshape(B, T, hidden)


# --------------------------------------------------------------------------- #
# Self-test
# --------------------------------------------------------------------------- #
if __name__ == "__main__":
    keys = jax.random.split(jax.random.PRNGKey(0), 9)

    # Case 1: small module-consistent shapes -> resident-weight (mode A) path.
    B, T, C_in, H = 2, 8, 32, 32
    x = jax.random.normal(keys[0], (B, T, C_in), dtype=jnp.float32)
    w = jax.random.normal(keys[1], (H, C_in), dtype=jnp.float32) * 0.1
    b = jax.random.normal(keys[2], (H,), dtype=jnp.float32) * 0.1
    out = jax.block_until_ready(encoder_with_fc(x, w, b, force_pallas=True))
    ref = x @ w.T + b
    assert out.shape == (B, T, H)
    assert jnp.allclose(out, ref, atol=1e-5, rtol=1e-5), "case 1 mismatch"

    # Case 2: unaligned M/K/N + explicit tn -> 2-D (M-outer, N-inner) path,
    # exercising cdiv-grid edge blocks with no padding at all.
    B2, T2, C2, H2 = 2, 100, 96, 192
    x2 = jax.random.normal(keys[3], (B2, T2, C2), dtype=jnp.float32)
    w2 = jax.random.normal(keys[4], (H2, C2), dtype=jnp.float32) * 0.05
    b2 = jax.random.normal(keys[5], (H2,), dtype=jnp.float32) * 0.05
    out2 = jax.block_until_ready(
        encoder_with_fc(x2, w2, b2, tn=128, force_pallas=True))
    ref2 = x2 @ w2.T + b2
    assert out2.shape == (B2, T2, H2)
    assert jnp.allclose(out2, ref2, atol=1e-4, rtol=1e-4), "case 2 mismatch"

    # Case 3: forced K tiling (mode C accumulator path), then the opt-in bf16
    # compute path on the same problem.
    B3, T3, C3, H3 = 2, 64, 256, 160
    x3 = jax.random.normal(keys[6], (B3, T3, C3), dtype=jnp.float32)
    w3 = jax.random.normal(keys[7], (H3, C3), dtype=jnp.float32) * 0.05
    b3 = jax.random.normal(keys[8], (H3,), dtype=jnp.float32) * 0.05
    ref3 = x3 @ w3.T + b3
    out3 = jax.block_until_ready(
        encoder_with_fc(x3, w3, b3, tk=128, force_pallas=True))
    assert out3.shape == (B3, T3, H3)
    assert jnp.allclose(out3, ref3, atol=1e-4, rtol=1e-4), "case 3 mismatch"

    out3b = jax.block_until_ready(
        encoder_with_fc(x3, w3, b3, compute_dtype=jnp.bfloat16, force_pallas=True))
    assert jnp.allclose(out3b, ref3, atol=7e-2, rtol=7e-2), "bf16 path mismatch"

    print("KERNEL_OK")
</pallas_src>

<mosaic_0001>
module attributes {stable_mosaic.version = 11 : i64} {
  func.func @_linear_kernel(%arg0: i32, %arg1: memref<16x32xf32, #tpu.memory_space<vmem>>, %arg2: memref<32x32xf32, #tpu.memory_space<vmem>>, %arg3: memref<1x32xf32, #tpu.memory_space<vmem>>, %arg4: memref<16x32xf32, #tpu.memory_space<vmem>>) attributes {dimension_semantics = [#tpu.dimension_semantics<parallel>], iteration_bounds = array<i64: 1>, scalar_prefetch = 0 : i64, scratch_operands = 0 : i64, tpu.core_type = #tpu.core_type<tc>, window_params = [{transform_indices = @transform_0, window_bounds = array<i64: 16, 32>}, {pipeline_mode = #tpu.pipeline_mode<synchronous>, transform_indices = @transform_1, window_bounds = array<i64: 32, 32>}, {pipeline_mode = #tpu.pipeline_mode<synchronous>, transform_indices = @transform_2, window_bounds = array<i64: 1, 32>}, {transform_indices = @transform_3, window_bounds = array<i64: 16, 32>}]} {
    %c0 = arith.constant 0 : index
    %c0_0 = arith.constant 0 : index
    %0 = vector.load %arg1[%c0, %c0_0] : memref<16x32xf32, #tpu.memory_space<vmem>>, vector<16x32xf32>
    %c0_1 = arith.constant 0 : index
    %c0_2 = arith.constant 0 : index
    %1 = vector.load %arg2[%c0_1, %c0_2] : memref<32x32xf32, #tpu.memory_space<vmem>>, vector<32x32xf32>
    %cst = arith.constant dense<0.000000e+00> : vector<16x32xf32>
    %2 = tpu.matmul %0, %1, %cst {dimension_numbers = #tpu.dot_dimension_numbers<[1], [0], [0], [1], [0, 0, 1, 1], [], []>} : vector<16x32xf32>, vector<32x32xf32>, vector<16x32xf32> -> vector<16x32xf32>
    %c0_3 = arith.constant 0 : index
    %c0_4 = arith.constant 0 : index
    %3 = vector.load %arg3[%c0_3, %c0_4] : memref<1x32xf32, #tpu.memory_space<vmem>>, vector<1x32xf32>
    %4 = vector.broadcast %3 : vector<1x32xf32> to vector<16x32xf32>
    %5 = arith.addf %2, %4 : vector<16x32xf32>
    %c0_5 = arith.constant 0 : index
    %c0_6 = arith.constant 0 : index
    %6 = vector.load %arg4[%c0_5, %c0_6] : memref<16x32xf32, #tpu.memory_space<vmem>>, vector<16x32xf32>
    tpu.vector_store %arg4[%c0_5, %c0_6], %5 {strides = array<i32>} : memref<16x32xf32, #tpu.memory_space<vmem>>, vector<16x32xf32>,
    return
  }
  func.func @transform_0(%arg0: i32) -> (i32, i32) {
    %c0_i32 = arith.constant 0 : i32
    %c0_i32_0 = arith.constant 0 : i32
    return %arg0, %c0_i32 : i32, i32
  }
  func.func @transform_1(%arg0: i32) -> (i32, i32) {
    %c0_i32 = arith.constant 0 : i32
    %c0_i32_0 = arith.constant 0 : i32
    %c0_i32_1 = arith.constant 0 : i32
    return %c0_i32, %c0_i32_0 : i32, i32
  }
  func.func @transform_2(%arg0: i32) -> (i32, i32) {
    %c0_i32 = arith.constant 0 : i32
    %c0_i32_0 = arith.constant 0 : i32
    %c0_i32_1 = arith.constant 0 : i32
    return %c0_i32, %c0_i32_0 : i32, i32
  }
  func.func @transform_3(%arg0: i32) -> (i32, i32) {
    %c0_i32 = arith.constant 0 : i32
    %c0_i32_0 = arith.constant 0 : i32
    return %arg0, %c0_i32 : i32, i32
  }
}

module attributes {stable_mosaic.version = 11 : i64} {
  func.func @_linear_kernel(%arg0: i32, %arg1: memref<16x32xf32, #tpu.memory_space<vmem>>, %arg2: memref<32x32xf32, #tpu.memory_space<vmem>>, %arg3: memref<1x32xf32, #tpu.memory_space<vmem>>, %arg4: memref<16x32xf32, #tpu.memory_space<vmem>>) attributes {dimension_semantics = [#tpu.dimension_semantics<parallel>], iteration_bounds = array<i64: 1>, scalar_prefetch = 0 : i64, scratch_operands = 0 : i64, tpu.core_type = #tpu.core_type<tc>, window_params = [{transform_indices = @transform_0, window_bounds = array<i64: 16, 32>}, {pipeline_mode = #tpu.pipeline_mode<synchronous>, transform_indices = @transform_1, window_bounds = array<i64: 32, 32>}, {pipeline_mode = #tpu.pipeline_mode<synchronous>, transform_indices = @transform_2, window_bounds = array<i64: 1, 32>}, {transform_indices = @transform_3, window_bounds = array<i64: 16, 32>}]} {
    %c0 = arith.constant 0 : index
    %c0_0 = arith.constant 0 : index
    %0 = vector.load %arg1[%c0, %c0_0] : memref<16x32xf32, #tpu.memory_space<vmem>>, vector<16x32xf32>
    %c0_1 = arith.constant 0 : index
    %c0_2 = arith.constant 0 : index
    %1 = vector.load %arg2[%c0_1, %c0_2] : memref<32x32xf32, #tpu.memory_space<vmem>>, vector<32x32xf32>
    %cst = arith.constant dense<0.000000e+00> : vector<16x32xf32>
    %2 = tpu.matmul %0, %1, %cst {dimension_numbers = #tpu.dot_dimension_numbers<[1], [0], [0], [1], [0, 0, 1, 1], [], []>} : vector<16x32xf32>, vector<32x32xf32>, vector<16x32xf32> -> vector<16x32xf32>
    %c0_3 = arith.constant 0 : index
    %c0_4 = arith.constant 0 : index
    %3 = vector.load %arg3[%c0_3, %c0_4] : memref<1x32xf32, #tpu.memory_space<vmem>>, vector<1x32xf32>
    %4 = vector.broadcast %3 : vector<1x32xf32> to vector<16x32xf32>
    %5 = arith.addf %2, %4 : vector<16x32xf32>
    %c0_5 = arith.constant 0 : index
    %c0_6 = arith.constant 0 : index
    %6 = vector.load %arg4[%c0_5, %c0_6] : memref<16x32xf32, #tpu.memory_space<vmem>>, vector<16x32xf32>
    tpu.vector_store %arg4[%c0_5, %c0_6], %5 {strides = array<i32>} : memref<16x32xf32, #tpu.memory_space<vmem>>, vector<16x32xf32>,
    return
  }
  func.func @transform_0(%arg0: i32) -> (i32, i32) {
    %c0_i32 = arith.constant 0 : i32
    %c0_i32_0 = arith.constant 0 : i32
    return %arg0, %c0_i32 : i32, i32
  }
  func.func @transform_1(%arg0: i32) -> (i32, i32) {
    %c0_i32 = arith.constant 0 : i32
    %c0_i32_0 = arith.constant 0 : i32
    %c0_i32_1 = arith.constant 0 : i32
    return %c0_i32, %c0_i32_0 : i32, i32
  }
  func.func @transform_2(%arg0: i32) -> (i32, i32) {
    %c0_i32 = arith.constant 0 : i32
    %c0_i32_0 = arith.constant 0 : i32
    %c0_i32_1 = arith.constant 0 : i32
    return %c0_i32, %c0_i32_0 : i32, i32
  }
  func.func @transform_3(%arg0: i32) -> (i32, i32) {
    %c0_i32 = arith.constant 0 : i32
    %c0_i32_0 = arith.constant 0 : i32
    return %arg0, %c0_i32 : i32, i32
  }
}

</mosaic_0001>

<llo_original>
// kernel: tpu_custom_call.1
$region0: #{tpu_custom_call.1}
  #allocation0 [shape = 'u32[]', space=smem, size = 0x4, offset = 0x4, fixed_abs, tag = 'smem constant byte address 0x4 - core index']
  #allocation1 [shape = 'u32[144,128]{1,0:T(1,128)}', space=vmem, size = 0x12000, scoped, tag = 'internal scratch']
  %s0 = inlined_call_operand.hbm [shape: f32[16,32], index: 0, kind: input, shape index: {}]
  %s1 = inlined_call_operand.hbm [shape: f32[32,32], index: 1, kind: input, shape index: {}]
  %s2 = inlined_call_operand.vmem [shape: f32[1,32], index: 2, kind: input, shape index: {}]
  %s3 = inlined_call_operand.hbm [shape: f32[16,32], index: 3, kind: output, shape index: {}]
  %s4 = sld [smem:[#allocation0]]
  $region30: #{tpu_custom_call.1} parent=0
    _
  %s6 = ssub.s32 1, %s4
  %s7 = scalar_select 0, %s6, %s4
  $region1: #{tpu_custom_call.1} parent=0
    #allocation2 [shape = 'u8[8192]{0}', space=vmem, size = 0x2000, scoped, tag = 'input window, operand 0, single buffered']
    #allocation3 [shape = 's32[1]{0}', space=sflag, size = 0x4, scoped, tag = 'scoped memory for tpu_custom_call.1']
    #allocation4 [shape = 's32[1]{0}', space=sflag, size = 0x4, scoped, tag = 'scoped memory for tpu_custom_call.1']
    #allocation5 [shape = 'u8[16384]{0}', space=vmem, size = 0x4000, scoped, tag = 'input window, operand 1, single buffered']
    #allocation6 [shape = 's32[1]{0}', space=sflag, size = 0x4, scoped, tag = 'scoped memory for tpu_custom_call.1']
    #allocation7 [shape = 'u8[8192]{0}', space=vmem, size = 0x2000, scoped, tag = 'output window, operand 0, single buffered']
    %8 = vsyncpa [#allocation3], 0
    %9 = vsyncpa [#allocation6], 0
    %10 = vsyncpa [#allocation4], 0
    // Predicated region
    $region2: #{tpu_custom_call.1} parent=1 // pred_check
      _
    $region3: #{tpu_custom_call.1} parent=1 // pred_check_branch
      %12 = sbr.rel (0) target = $region5
    $region4: #{tpu_custom_call.1} parent=1 // pred_region
      %s14 = ssub.s32 256, 256
      %15 = vsyncadd [#allocation3], %s14
      %s16 = sshll.u32 [#allocation2], 4
      %s17 = int_to_ptr.vmem [resolvable:$true] %s16
      %22 = dma.hbm_to_vmem [thread:$0]  %s0, 256, %s17, [#allocation3], 128, 128, 8
    $region5: #{tpu_custom_call.1} parent=1 // pred_fallthru
      _
    // Predicated region
    $region6: #{tpu_custom_call.1} parent=1 // pred_check
      _
    $region7: #{tpu_custom_call.1} parent=1 // pred_check_branch
      %24 = sbr.rel (0) target = $region9
    $region8: #{tpu_custom_call.1} parent=1 // pred_region
      %s26 = ssub.s32 512, 512
      %27 = vsyncadd [#allocation6], %s26
      %s28 = sshll.u32 [#allocation5], 4
      %s29 = int_to_ptr.vmem [resolvable:$true] %s28
      %34 = dma.hbm_to_vmem [thread:$0]  %s1, 512, %s29, [#allocation6], 128, 128, 8
    $region9: #{tpu_custom_call.1} parent=1 // pred_fallthru
      _
    // Predicated region
    $region10: #{tpu_custom_call.1} parent=1 // pred_check
      _
    $region11: #{tpu_custom_call.1} parent=1 // pred_check_branch
      %36 = sbr.rel (0) target = $region13
    $region12: #{tpu_custom_call.1} parent=1 // pred_region
      _
    $region13: #{tpu_custom_call.1} parent=1 // pred_fallthru
      _
    // Predicated region
    $region14: #{tpu_custom_call.1} parent=1 // pred_check
      _
    $region15: #{tpu_custom_call.1} parent=1 // pred_check_branch
      %38 = sbr.rel (0) target = $region17
    $region16: #{tpu_custom_call.1} parent=1 // pred_region
      %39 = dma.done [#allocation3], 256
    $region17: #{tpu_custom_call.1} parent=1 // pred_fallthru
      _
    // Predicated region
    $region18: #{tpu_custom_call.1} parent=1 // pred_check
      _
    $region19: #{tpu_custom_call.1} parent=1 // pred_check_branch
      %41 = sbr.rel (0) target = $region21
    $region20: #{tpu_custom_call.1} parent=1 // pred_region
      %42 = dma.done [#allocation6], 512
    $region21: #{tpu_custom_call.1} parent=1 // pred_fallthru
      _
    %v43 = vld [vmem:[#allocation2] sm:$0xff]
    %v44 = vld [vmem:[#allocation2 + $0x8] sm:$0xff]
    %v45 = vld [vmem:[#allocation5] sm:$0xff]
    %v46 = vld [vmem:[#allocation5 + $0x8] sm:$0xff]
    %v47 = vld [vmem:[#allocation5 + $0x10] sm:$0xff]
    %v48 = vld [vmem:[#allocation5 + $0x18] sm:$0xff]
    %v49 = vld [vmem:[%s2] sm:$0x1]
    %v51 = vlaneseq
    %v52 = vshrl.u32 %v51, 7
    %v53 = vsub.s32 0, %v52
    %v54 = vrot.slane %v49, %v53
    %vm56 = vcmask 261120
    %v58 = vsel %vm56, %v43, 0
    %v61 = vsel %vm56, %v44, 0
    %63 = vmatprep.subr.mxu0 0.0
    %64 = vmatpush1.msra.mxu0 %v45
    %65 = vmatprep.subr.mxu0 0.0
    %66 = vmatpush1.msra.mxu0 %v46
    %67 = vmatprep.subr.mxu0 0.0
    %68 = vmatpush1.msra.mxu0 %v47
    %69 = vmatprep.subr.mxu0 0.0
    %70 = vmatpush1.msra.mxu0 %v48
    %71 = vmatprep.subr.mxu0 0.0
    %72 = vmatpush1.msra.mxu0 0.0
    %73 = vmatprep.subr.mxu0 0.0
    %74 = vmatpush1.msra.mxu0 0.0
    %75 = vmatprep.subr.mxu0 0.0
    %76 = vmatpush1.msra.mxu0 0.0
    %77 = vmatprep.subr.mxu0 0.0
    %78 = vmatpush1.msra.mxu0 0.0
    %79 = vmatprep.subr.mxu0 0.0
    %80 = vmatpush1.msra.mxu0 0.0
    %81 = vmatprep.subr.mxu0 0.0
    %82 = vmatpush1.msra.mxu0 0.0
    %83 = vmatprep.subr.mxu0 0.0
    %84 = vmatpush1.msra.mxu0 0.0
    %85 = vmatprep.subr.mxu0 0.0
    %86 = vmatpush1.msra.mxu0 0.0
    %87 = vmatprep.subr.mxu0 0.0
    %88 = vmatpush1.msra.mxu0 0.0
    %89 = vmatprep.subr.mxu0 0.0
    %90 = vmatpush1.msra.mxu0 0.0
    %91 = vmatprep.subr.mxu0 0.0
    %92 = vmatpush1.msra.mxu0 0.0
    %93 = vmatprep.subr.mxu0 0.0
    %94 = vmatpush1.msra.mxu0 0.0
    %95 = vmatprep.subr.mxu0 0.0
    %96 = vmatpush1.msra.mxu0 0.0
    %97 = vmatprep.subr.mxu0 0.0
    %98 = vmatpush1.msra.mxu0 0.0
    %99 = vmatprep.subr.mxu0 0.0
    %100 = vmatpush1.msra.mxu0 0.0
    %101 = vmatprep.subr.mxu0 0.0
    %102 = vmatpush1.msra.mxu0 0.0
    %103 = vmatprep.subr.mxu0 0.0
    %104 = vmatpush1.msra.mxu0 0.0
    %105 = vmatprep.subr.mxu0 0.0
    %106 = vmatpush1.msra.mxu0 0.0
    %107 = vmatprep.subr.mxu0 0.0
    %108 = vmatpush1.msra.mxu0 0.0
    %109 = vmatprep.subr.mxu0 0.0
    %110 = vmatpush1.msra.mxu0 0.0
    %111 = vmatprep.subr.mxu0 0.0
    %112 = vmatpush1.msra.mxu0 0.0
    %113 = vmatprep.subr.mxu0 0.0
    %114 = vmatpush1.msra.mxu0 0.0
    %115 = vmatprep.subr.mxu0 0.0
    %116 = vmatpush1.msra.mxu0 0.0
    %117 = vmatprep.subr.mxu0 0.0
    %118 = vmatpush1.msra.mxu0 0.0
    %119 = vmatprep.subr.mxu0 0.0
    %120 = vmatpush1.msra.mxu0 0.0
    %121 = vmatprep.subr.mxu0 0.0
    %122 = vmatpush1.msra.mxu0 0.0
    %123 = vmatprep.subr.mxu0 0.0
    %124 = vmatpush1.msra.mxu0 0.0
    %125 = vmatprep.subr.mxu0 0.0
    %126 = vmatpush1.msra.mxu0 0.0
    %127 = vmatprep.mubr.f32.mxu0 0.0
    %128 = vmatmul.mubr.f32.gmra.mrb[0].mxu0 %v58
    %v129 = vpop.f32.mrb[0].mxu0
    %v130 = vadd.f32 %v54, %v129
    %v131 = vpop.f32.mrb[0].mxu0
    %132 = vmatprep.mubr.f32.mxu0 0.0
    %133 = vmatmul.mubr.f32.gmra.mrb[0].mxu0 %v61
    %v134 = vpop.f32.mrb[0].mxu0
    %v135 = vadd.f32 %v54, %v134
    %v136 = vpop.f32.mrb[0].mxu0
    %137 = vdwg.mxu0
    %138 = vst.msk [vmem:[#allocation7] sm:$0xff] %vm56, %v130
    %139 = vst.msk [vmem:[#allocation7 + $0x8] sm:$0xff] %vm56, %v135
    // Predicated region
    $region22: #{tpu_custom_call.1} parent=1 // pred_check
      _
    $region23: #{tpu_custom_call.1} parent=1 // pred_check_branch
      %141 = sbr.rel (0) target = $region25
    $region24: #{tpu_custom_call.1} parent=1 // pred_region
      %s143 = ssub.s32 256, 256
      %144 = vsyncadd [#allocation4], %s143
      %s145 = sshll.u32 [#allocation7], 4
      %s146 = int_to_ptr.vmem [resolvable:$true] %s145
      %151 = dma.vmem_to_hbm [thread:$0]  %s146, 256, %s3, [#allocation4], 128, 128, 8
    $region25: #{tpu_custom_call.1} parent=1 // pred_fallthru
      _
    // Predicated region
    $region26: #{tpu_custom_call.1} parent=1 // pred_check
      _
    $region27: #{tpu_custom_call.1} parent=1 // pred_check_branch
      %153 = sbr.rel (0) target = $region29
    $region28: #{tpu_custom_call.1} parent=1 // pred_region
      %154 = dma.done [#allocation4], 256
    $region29: #{tpu_custom_call.1} parent=1 // pred_fallthru
      _
    %155 = vsyncpa [#allocation3], 1
    %156 = vsyncpa [#allocation6], 1
    %157 = vsyncpa [#allocation4], 1

// kernel: tpu_custom_call.1
$region0: #{tpu_custom_call.1}
  #allocation0 [shape = 'u32[]', space=smem, size = 0x4, offset = 0x4, fixed_abs, tag = 'smem constant byte address 0x4 - core index']
  #allocation1 [shape = 'u32[144,128]{1,0:T(1,128)}', space=vmem, size = 0x12000, scoped, tag = 'internal scratch']
  %s0 = inlined_call_operand.hbm [shape: f32[16,32], index: 0, kind: input, shape index: {}]
  %s1 = inlined_call_operand.hbm [shape: f32[32,32], index: 1, kind: input, shape index: {}]
  %s2 = inlined_call_operand.vmem [shape: f32[1,32], index: 2, kind: input, shape index: {}]
  %s3 = inlined_call_operand.hbm [shape: f32[16,32], index: 3, kind: output, shape index: {}]
  %s4 = sld [smem:[#allocation0]]
  $region30: #{tpu_custom_call.1} parent=0
    _
  %s6 = ssub.s32 1, %s4
  %s7 = scalar_select 0, %s6, %s4
  $region1: #{tpu_custom_call.1} parent=0
    #allocation2 [shape = 'u8[8192]{0}', space=vmem, size = 0x2000, scoped, tag = 'input window, operand 0, single buffered']
    #allocation3 [shape = 's32[1]{0}', space=sflag, size = 0x4, scoped, tag = 'scoped memory for tpu_custom_call.1']
    #allocation4 [shape = 's32[1]{0}', space=sflag, size = 0x4, scoped, tag = 'scoped memory for tpu_custom_call.1']
    #allocation5 [shape = 'u8[16384]{0}', space=vmem, size = 0x4000, scoped, tag = 'input window, operand 1, single buffered']
    #allocation6 [shape = 's32[1]{0}', space=sflag, size = 0x4, scoped, tag = 'scoped memory for tpu_custom_call.1']
    #allocation7 [shape = 'u8[8192]{0}', space=vmem, size = 0x2000, scoped, tag = 'output window, operand 0, single buffered']
    %8 = vsyncpa [#allocation3], 0
    %9 = vsyncpa [#allocation6], 0
    %10 = vsyncpa [#allocation4], 0
    // Predicated region
    $region2: #{tpu_custom_call.1} parent=1 // pred_check
      _
    $region3: #{tpu_custom_call.1} parent=1 // pred_check_branch
      %12 = sbr.rel (0) target = $region5
    $region4: #{tpu_custom_call.1} parent=1 // pred_region
      %s14 = ssub.s32 256, 256
      %15 = vsyncadd [#allocation3], %s14
      %s16 = sshll.u32 [#allocation2], 4
      %s17 = int_to_ptr.vmem [resolvable:$true] %s16
      %22 = dma.hbm_to_vmem [thread:$0]  %s0, 256, %s17, [#allocation3], 128, 128, 8
    $region5: #{tpu_custom_call.1} parent=1 // pred_fallthru
      _
    // Predicated region
    $region6: #{tpu_custom_call.1} parent=1 // pred_check
      _
    $region7: #{tpu_custom_call.1} parent=1 // pred_check_branch
      %24 = sbr.rel (0) target = $region9
    $region8: #{tpu_custom_call.1} parent=1 // pred_region
      %s26 = ssub.s32 512, 512
      %27 = vsyncadd [#allocation6], %s26
      %s28 = sshll.u32 [#allocation5], 4
      %s29 = int_to_ptr.vmem [resolvable:$true] %s28
      %34 = dma.hbm_to_vmem [thread:$0]  %s1, 512, %s29, [#allocation6], 128, 128, 8
    $region9: #{tpu_custom_call.1} parent=1 // pred_fallthru
      _
    // Predicated region
    $region10: #{tpu_custom_call.1} parent=1 // pred_check
      _
    $region11: #{tpu_custom_call.1} parent=1 // pred_check_branch
      %36 = sbr.rel (0) target = $region13
    $region12: #{tpu_custom_call.1} parent=1 // pred_region
      _
    $region13: #{tpu_custom_call.1} parent=1 // pred_fallthru
      _
    // Predicated region
    $region14: #{tpu_custom_call.1} parent=1 // pred_check
      _
    $region15: #{tpu_custom_call.1} parent=1 // pred_check_branch
      %38 = sbr.rel (0) target = $region17
    $region16: #{tpu_custom_call.1} parent=1 // pred_region
      %39 = dma.done [#allocation3], 256
    $region17: #{tpu_custom_call.1} parent=1 // pred_fallthru
      _
    // Predicated region
    $region18: #{tpu_custom_call.1} parent=1 // pred_check
      _
    $region19: #{tpu_custom_call.1} parent=1 // pred_check_branch
      %41 = sbr.rel (0) target = $region21
    $region20: #{tpu_custom_call.1} parent=1 // pred_region
      %42 = dma.done [#allocation6], 512
    $region21: #{tpu_custom_call.1} parent=1 // pred_fallthru
      _
    %v43 = vld [vmem:[#allocation2] sm:$0xff]
    %v44 = vld [vmem:[#allocation2 + $0x8] sm:$0xff]
    %v45 = vld [vmem:[#allocation5] sm:$0xff]
    %v46 = vld [vmem:[#allocation5 + $0x8] sm:$0xff]
    %v47 = vld [vmem:[#allocation5 + $0x10] sm:$0xff]
    %v48 = vld [vmem:[#allocation5 + $0x18] sm:$0xff]
    %v49 = vld [vmem:[%s2] sm:$0x1]
    %v51 = vlaneseq
    %v52 = vshrl.u32 %v51, 7
    %v53 = vsub.s32 0, %v52
    %v54 = vrot.slane %v49, %v53
    %vm56 = vcmask 261120
    %v58 = vsel %vm56, %v43, 0
    %v61 = vsel %vm56, %v44, 0
    %63 = vmatprep.subr.mxu0 0.0
    %64 = vmatpush1.msra.mxu0 %v45
    %65 = vmatprep.subr.mxu0 0.0
    %66 = vmatpush1.msra.mxu0 %v46
    %67 = vmatprep.subr.mxu0 0.0
    %68 = vmatpush1.msra.mxu0 %v47
    %69 = vmatprep.subr.mxu0 0.0
    %70 = vmatpush1.msra.mxu0 %v48
    %71 = vmatprep.subr.mxu0 0.0
    %72 = vmatpush1.msra.mxu0 0.0
    %73 = vmatprep.subr.mxu0 0.0
    %74 = vmatpush1.msra.mxu0 0.0
    %75 = vmatprep.subr.mxu0 0.0
    %76 = vmatpush1.msra.mxu0 0.0
    %77 = vmatprep.subr.mxu0 0.0
    %78 = vmatpush1.msra.mxu0 0.0
    %79 = vmatprep.subr.mxu0 0.0
    %80 = vmatpush1.msra.mxu0 0.0
    %81 = vmatprep.subr.mxu0 0.0
    %82 = vmatpush1.msra.mxu0 0.0
    %83 = vmatprep.subr.mxu0 0.0
    %84 = vmatpush1.msra.mxu0 0.0
    %85 = vmatprep.subr.mxu0 0.0
    %86 = vmatpush1.msra.mxu0 0.0
    %87 = vmatprep.subr.mxu0 0.0
    %88 = vmatpush1.msra.mxu0 0.0
    %89 = vmatprep.subr.mxu0 0.0
    %90 = vmatpush1.msra.mxu0 0.0
    %91 = vmatprep.subr.mxu0 0.0
    %92 = vmatpush1.msra.mxu0 0.0
    %93 = vmatprep.subr.mxu0 0.0
    %94 = vmatpush1.msra.mxu0 0.0
    %95 = vmatprep.subr.mxu0 0.0
    %96 = vmatpush1.msra.mxu0 0.0
    %97 = vmatprep.subr.mxu0 0.0
    %98 = vmatpush1.msra.mxu0 0.0
    %99 = vmatprep.subr.mxu0 0.0
    %100 = vmatpush1.msra.mxu0 0.0
    %101 = vmatprep.subr.mxu0 0.0
    %102 = vmatpush1.msra.mxu0 0.0
    %103 = vmatprep.subr.mxu0 0.0
    %104 = vmatpush1.msra.mxu0 0.0
    %105 = vmatprep.subr.mxu0 0.0
    %106 = vmatpush1.msra.mxu0 0.0
    %107 = vmatprep.subr.mxu0 0.0
    %108 = vmatpush1.msra.mxu0 0.0
    %109 = vmatprep.subr.mxu0 0.0
    %110 = vmatpush1.msra.mxu0 0.0
    %111 = vmatprep.subr.mxu0 0.0
    %112 = vmatpush1.msra.mxu0 0.0
    %113 = vmatprep.subr.mxu0 0.0
    %114 = vmatpush1.msra.mxu0 0.0
    %115 = vmatprep.subr.mxu0 0.0
    %116 = vmatpush1.msra.mxu0 0.0
    %117 = vmatprep.subr.mxu0 0.0
    %118 = vmatpush1.msra.mxu0 0.0
    %119 = vmatprep.subr.mxu0 0.0
    %120 = vmatpush1.msra.mxu0 0.0
    %121 = vmatprep.subr.mxu0 0.0
    %122 = vmatpush1.msra.mxu0 0.0
    %123 = vmatprep.subr.mxu0 0.0
    %124 = vmatpush1.msra.mxu0 0.0
    %125 = vmatprep.subr.mxu0 0.0
    %126 = vmatpush1.msra.mxu0 0.0
    %127 = vmatprep.mubr.f32.mxu0 0.0
    %128 = vmatmul.mubr.f32.gmra.mrb[0].mxu0 %v58
    %v129 = vpop.f32.mrb[0].mxu0
    %v130 = vadd.f32 %v54, %v129
    %v131 = vpop.f32.mrb[0].mxu0
    %132 = vmatprep.mubr.f32.mxu0 0.0
    %133 = vmatmul.mubr.f32.gmra.mrb[0].mxu0 %v61
    %v134 = vpop.f32.mrb[0].mxu0
    %v135 = vadd.f32 %v54, %v134
    %v136 = vpop.f32.mrb[0].mxu0
    %137 = vdwg.mxu0
    %138 = vst.msk [vmem:[#allocation7] sm:$0xff] %vm56, %v130
    %139 = vst.msk [vmem:[#allocation7 + $0x8] sm:$0xff] %vm56, %v135
    // Predicated region
    $region22: #{tpu_custom_call.1} parent=1 // pred_check
      _
    $region23: #{tpu_custom_call.1} parent=1 // pred_check_branch
      %141 = sbr.rel (0) target = $region25
    $region24: #{tpu_custom_call.1} parent=1 // pred_region
      %s143 = ssub.s32 256, 256
      %144 = vsyncadd [#allocation4], %s143
      %s145 = sshll.u32 [#allocation7], 4
      %s146 = int_to_ptr.vmem [resolvable:$true] %s145
      %151 = dma.vmem_to_hbm [thread:$0]  %s146, 256, %s3, [#allocation4], 128, 128, 8
    $region25: #{tpu_custom_call.1} parent=1 // pred_fallthru
      _
    // Predicated region
    $region26: #{tpu_custom_call.1} parent=1 // pred_check
      _
    $region27: #{tpu_custom_call.1} parent=1 // pred_check_branch
      %153 = sbr.rel (0) target = $region29
    $region28: #{tpu_custom_call.1} parent=1 // pred_region
      %154 = dma.done [#allocation4], 256
    $region29: #{tpu_custom_call.1} parent=1 // pred_fallthru
      _
    %155 = vsyncpa [#allocation3], 1
    %156 = vsyncpa [#allocation6], 1
    %157 = vsyncpa [#allocation4], 1

</llo_original>
